<compile_context>
chip_gen: v5e
topology: v5e:2x2
jax: 0.10.0
libtpu: 0.0.40
codegen_flags: <defaults>
</compile_context>

<pallas_src>
import functools

import jax
import jax.numpy as jnp
from jax import lax
from jax.experimental import pallas as pl
from jax.experimental.pallas import tpu as pltpu


def _tpu_generation() -> int:
    """Best-effort TPU generation: 7 (v7x), 6 (v6e), 5 (v5e/v5p), ... 0 if unknown."""
    try:
        kind = jax.devices()[0].device_kind.lower()
    except Exception:
        return 0
    for g in (7, 6, 5, 4, 3):
        if f"v{g}" in kind:
            return g
    return 0


def _pick_row_tile(n: int, gen: int) -> int:
    """Largest MXU-friendly row tile dividing N (smaller preference on v7x's 64 MiB VMEM)."""
    candidates = (256, 128) if gen >= 7 else (512, 256, 128)
    for t in candidates:
        if n % t == 0:
            return t
    return n  # full sequence as a single tile (e.g. ViT N=197)


def _clamp_vmem(est_bytes: int, gen: int, floor: int = 32 * 2 ** 20) -> int:
    # Never request the full physical per-TC VMEM on v7x (leave compiler headroom).
    cap = (48 if gen >= 7 else 64) * 2 ** 20
    return int(min(cap, max(floor, est_bytes)))


# ----------------------------- Stage 1: QKV projection -----------------------------

def qkv_proj_kernel(x_ref, wq_ref, wkv_ref, q_ref, kv_ref):
    """One (TM, C) row tile: scaled-Q (TM, C) and K|V (TM, 2C). bf16 MXU, f32 accumulate."""
    x = x_ref[...]
    q_ref[...] = jnp.dot(x, wq_ref[...],
                         preferred_element_type=jnp.float32).astype(q_ref.dtype)
    kv_ref[...] = jnp.dot(x, wkv_ref[...],
                          preferred_element_type=jnp.float32).astype(kv_ref.dtype)


# ------------------------- Stage 2: attention + out projection ---------------------

def attention_kernel(q_ref, kv_ref, wproj_ref, bproj_ref, o_ref, *,
                     num_heads, head_dim, exp_in_bf16):
    """Grid = (B, N // TQ), both axes parallel.

    q_ref    : (TQ, C)  bf16  scaled-Q rows for this tile (scale folded into weights)
    kv_ref   : (N, 2C)  bf16  full-sequence K | V for this batch element
    wproj_ref: (C, C)   bf16
    bproj_ref: (1, C)   f32
    o_ref    : (TQ, C)  output dtype
    """
    C = num_heads * head_dim
    acc = jnp.zeros(o_ref.shape, jnp.float32)   # (TQ, C) f32 projection accumulator

    # Static head loop; each head's (TQ, N) temporaries are consumed in-iteration.
    for h in range(num_heads):
        lo = h * head_dim
        hi = lo + head_dim
        qh = q_ref[:, lo:hi]                     # (TQ, D) bf16
        kh = kv_ref[:, lo:hi]                    # (N,  D) bf16
        vh = kv_ref[:, C + lo:C + hi]            # (N,  D) bf16

        # q @ k^T without an explicit transpose: contract the last dims on the MXU.
        s = lax.dot_general(qh, kh, (((1,), (1,)), ((), ())),
                            preferred_element_type=jnp.float32)   # (TQ, N) f32
        s = s - jnp.max(s, axis=-1, keepdims=True)

        if exp_in_bf16:
            # v6e / v7x: bf16 EUP (~2x transcendental throughput).
            p = jnp.exp(s.astype(jnp.bfloat16))                    # (TQ, N) bf16
        else:
            # v5e: no bf16 EUP/VPU -> keep exp in f32.
            p = jnp.exp(s)                                         # (TQ, N) f32
        l = jnp.sum(p, axis=-1, keepdims=True, dtype=jnp.float32)  # (TQ, 1) f32

        # Unnormalized context; normalize on the small (TQ, D) tile, not (TQ, N).
        ctx = jnp.dot(p.astype(jnp.bfloat16), vh,
                      preferred_element_type=jnp.float32)          # (TQ, D) f32
        ctx = ctx * pl.reciprocal(l, approx=True)

        # Fold this head's context straight into the output projection:
        # (TQ, D) @ Wproj[lo:hi, :] -> dense 128-lane-wide accumulation, no masked
        # 64-lane-offset context stores.
        acc = acc + jnp.dot(ctx.astype(jnp.bfloat16), wproj_ref[lo:hi, :],
                            preferred_element_type=jnp.float32)    # (TQ, C) f32

    o_ref[...] = (acc + bproj_ref[...]).astype(o_ref.dtype)


# ------------------------------------ Wrapper --------------------------------------

def attention_forward(x, w_qkv_t, w_proj_t, b_proj, num_heads):
    """x: (B, N, C); w_qkv_t: (C, 3C); w_proj_t: (C, C); b_proj: (C,) or (1, C)."""
    B, N, C = x.shape
    assert C % num_heads == 0, "dim should be divisible by num_heads"
    head_dim = C // num_heads
    scale = head_dim ** (-0.5)
    gen = _tpu_generation()

    # One-time host-side weight transforms: split Q vs K|V, fold the softmax scale
    # into the Q columns, cast MXU operands to bf16.
    w_q = (w_qkv_t[:, :C] * scale).astype(jnp.bfloat16)            # (C, C)
    w_kv = w_qkv_t[:, C:].astype(jnp.bfloat16)                     # (C, 2C)
    w_proj = w_proj_t.astype(jnp.bfloat16)                         # (C, C)
    b_proj_f32 = jnp.asarray(b_proj, jnp.float32).reshape(1, C)
    x_bf = x.astype(jnp.bfloat16)

    tile = _pick_row_tile(N, gen)
    n_tiles = N // tile
    bf16, f32 = 2, 4

    # ---- Stage 1: QKV projection (row-tiled matmul, fully parallel grid). ----
    proj_est = int(1.4 * (2 * tile * C * bf16                  # x block (double-buffered)
                          + 2 * (C * C + C * 2 * C) * bf16     # weights (double-buffered)
                          + 2 * tile * 3 * C * bf16            # output blocks
                          + tile * 3 * C * f32))               # f32 matmul temporaries
    q_scaled, kv = pl.pallas_call(
        qkv_proj_kernel,
        out_shape=(jax.ShapeDtypeStruct((B, N, C), jnp.bfloat16),
                   jax.ShapeDtypeStruct((B, N, 2 * C), jnp.bfloat16)),
        grid_spec=pltpu.PrefetchScalarGridSpec(
            num_scalar_prefetch=0,
            grid=(B, n_tiles),
            in_specs=[
                pl.BlockSpec((None, tile, C), lambda b, i: (b, i, 0)),
                pl.BlockSpec((C, C), lambda b, i: (0, 0)),
                pl.BlockSpec((C, 2 * C), lambda b, i: (0, 0)),
            ],
            out_specs=[
                pl.BlockSpec((None, tile, C), lambda b, i: (b, i, 0)),
                pl.BlockSpec((None, tile, 2 * C), lambda b, i: (b, i, 0)),
            ],
        ),
        compiler_params=pltpu.CompilerParams(
            dimension_semantics=("parallel", "parallel"),
            vmem_limit_bytes=_clamp_vmem(proj_est, gen, floor=16 * 2 ** 20)),
    )(x_bf, w_q, w_kv)

    # ---- Stage 2: attention + output projection. ----
    attn_est = int(1.4 * (2 * tile * C * bf16                  # q tile (double-buffered)
                          + 2 * N * 2 * C * bf16               # K|V block (double-buffered)
                          + 2 * C * C * bf16 + 2 * C * f32     # weights + bias
                          + 2 * tile * C * x.dtype.itemsize    # output block
                          + 2 * tile * N * f32                 # score/prob temporaries
                          + tile * C * f32))                   # projection accumulator
    kernel = functools.partial(attention_kernel, num_heads=num_heads,
                               head_dim=head_dim, exp_in_bf16=(gen >= 6))
    out = pl.pallas_call(
        kernel,
        out_shape=jax.ShapeDtypeStruct((B, N, C), x.dtype),
        grid_spec=pltpu.PrefetchScalarGridSpec(
            num_scalar_prefetch=0,
            grid=(B, n_tiles),
            in_specs=[
                pl.BlockSpec((None, tile, C), lambda b, i: (b, i, 0)),
                pl.BlockSpec((None, N, 2 * C), lambda b, i: (b, 0, 0)),
                pl.BlockSpec((C, C), lambda b, i: (0, 0)),
                pl.BlockSpec((1, C), lambda b, i: (0, 0)),
            ],
            out_specs=pl.BlockSpec((None, tile, C), lambda b, i: (b, i, 0)),
        ),
        compiler_params=pltpu.CompilerParams(
            dimension_semantics=("parallel", "parallel"),
            vmem_limit_bytes=_clamp_vmem(attn_est, gen)),
    )(q_scaled, kv, w_proj, b_proj_f32)
    return out


def attention_reference(x, w_qkv_t, w_proj_t, b_proj, num_heads):
    """Pure-JAX f32 reference mirroring the PyTorch forward exactly."""
    B, N, C = x.shape
    D = C // num_heads
    scale = D ** (-0.5)
    qkv = x @ w_qkv_t                                        # (B, N, 3C)
    qkv = qkv.reshape(B, N, 3, num_heads, D).transpose(2, 0, 3, 1, 4)
    q, k, v = qkv[0], qkv[1], qkv[2]                         # (B, H, N, D)
    attn = (q * scale) @ jnp.swapaxes(k, -2, -1)             # (B, H, N, N)
    attn = jax.nn.softmax(attn, axis=-1)
    out = attn @ v                                           # (B, H, N, D)
    out = jnp.transpose(out, (0, 2, 1, 3)).reshape(B, N, C)
    return out @ w_proj_t + b_proj


if __name__ == "__main__":
    # Small shapes consistent with the module: dim=32, num_heads=4 -> head_dim=8.
    B, N, C = 2, 8, 32
    num_heads = 4

    key = jax.random.PRNGKey(0)
    kx, kqkv, kproj, kbias = jax.random.split(key, 4)

    x = jax.random.normal(kx, (B, N, C), dtype=jnp.float32)

    # Synthetic parameters (torch Linear weight is (out, in); we store the transpose).
    w_qkv_t = 0.05 * jax.random.normal(kqkv, (C, 3 * C), dtype=jnp.float32)
    w_proj_t = 0.05 * jax.random.normal(kproj, (C, C), dtype=jnp.float32)
    b_proj = 0.01 * jax.random.normal(kbias, (C,), dtype=jnp.float32)

    out = attention_forward(x, w_qkv_t, w_proj_t, b_proj, num_heads)
    out = jax.block_until_ready(out)

    ref = attention_reference(x, w_qkv_t, w_proj_t, b_proj, num_heads)
    assert out.shape == (B, N, C)
    max_err = float(jnp.max(jnp.abs(out - ref)))
    # bf16 MXU operands, bf16 exp (v6e/v7x) + approx reciprocal => small drift vs f32 ref.
    assert jnp.allclose(out, ref, rtol=3e-2, atol=3e-2), \
        f"mismatch vs reference (max abs err {max_err})"

    print("KERNEL_OK")
</pallas_src>

<mosaic_0001>
module attributes {stable_mosaic.version = 11 : i64} {
  func.func @qkv_proj_kernel(%arg0: i32, %arg1: i32, %arg2: memref<1x8x32xbf16, #tpu.memory_space<vmem>>, %arg3: memref<32x32xbf16, #tpu.memory_space<vmem>>, %arg4: memref<32x64xbf16, #tpu.memory_space<vmem>>, %arg5: memref<1x8x32xbf16, #tpu.memory_space<vmem>>, %arg6: memref<1x8x64xbf16, #tpu.memory_space<vmem>>) attributes {dimension_semantics = [#tpu.dimension_semantics<parallel>, #tpu.dimension_semantics<parallel>], iteration_bounds = array<i64: 2, 1>, scalar_prefetch = 0 : i64, scratch_operands = 0 : i64, tpu.core_type = #tpu.core_type<tc>, window_params = [{transform_indices = @transform_0, window_bounds = array<i64: 1, 8, 32>}, {pipeline_mode = #tpu.pipeline_mode<synchronous>, transform_indices = @transform_1, window_bounds = array<i64: 32, 32>}, {pipeline_mode = #tpu.pipeline_mode<synchronous>, transform_indices = @transform_2, window_bounds = array<i64: 32, 64>}, {transform_indices = @transform_3, window_bounds = array<i64: 1, 8, 32>}, {transform_indices = @transform_4, window_bounds = array<i64: 1, 8, 64>}]} {
    %c0 = arith.constant 0 : index
    %c0_0 = arith.constant 0 : index
    %c0_1 = arith.constant 0 : index
    %0 = vector.load %arg2[%c0, %c0_0, %c0_1] : memref<1x8x32xbf16, #tpu.memory_space<vmem>>, vector<1x8x32xbf16>
    %1 = vector.shape_cast %0 : vector<1x8x32xbf16> to vector<8x32xbf16>
    %c0_2 = arith.constant 0 : index
    %c0_3 = arith.constant 0 : index
    %2 = vector.load %arg3[%c0_2, %c0_3] : memref<32x32xbf16, #tpu.memory_space<vmem>>, vector<32x32xbf16>
    %cst = arith.constant dense<0.000000e+00> : vector<8x32xf32>
    %3 = tpu.matmul %1, %2, %cst {dimension_numbers = #tpu.dot_dimension_numbers<[1], [0], [0], [1], [0, 0, 1, 1], [], []>} : vector<8x32xbf16>, vector<32x32xbf16>, vector<8x32xf32> -> vector<8x32xf32>
    %4 = arith.truncf %3 : vector<8x32xf32> to vector<8x32xbf16>
    %c0_4 = arith.constant 0 : index
    %c0_5 = arith.constant 0 : index
    %c0_6 = arith.constant 0 : index
    %5 = vector.load %arg5[%c0_4, %c0_5, %c0_6] : memref<1x8x32xbf16, #tpu.memory_space<vmem>>, vector<1x8x32xbf16>
    %6 = vector.shape_cast %5 : vector<1x8x32xbf16> to vector<8x32xbf16>
    %7 = vector.shape_cast %4 : vector<8x32xbf16> to vector<1x8x32xbf16>
    tpu.vector_store %arg5[%c0_4, %c0_5, %c0_6], %7 {strides = array<i32>} : memref<1x8x32xbf16, #tpu.memory_space<vmem>>, vector<1x8x32xbf16>,
    %c0_7 = arith.constant 0 : index
    %c0_8 = arith.constant 0 : index
    %8 = vector.load %arg4[%c0_7, %c0_8] : memref<32x64xbf16, #tpu.memory_space<vmem>>, vector<32x64xbf16>
    %cst_9 = arith.constant dense<0.000000e+00> : vector<8x64xf32>
    %9 = tpu.matmul %1, %8, %cst_9 {dimension_numbers = #tpu.dot_dimension_numbers<[1], [0], [0], [1], [0, 0, 1, 1], [], []>} : vector<8x32xbf16>, vector<32x64xbf16>, vector<8x64xf32> -> vector<8x64xf32>
    %10 = arith.truncf %9 : vector<8x64xf32> to vector<8x64xbf16>
    %c0_10 = arith.constant 0 : index
    %c0_11 = arith.constant 0 : index
    %c0_12 = arith.constant 0 : index
    %11 = vector.load %arg6[%c0_10, %c0_11, %c0_12] : memref<1x8x64xbf16, #tpu.memory_space<vmem>>, vector<1x8x64xbf16>
    %12 = vector.shape_cast %11 : vector<1x8x64xbf16> to vector<8x64xbf16>
    %13 = vector.shape_cast %10 : vector<8x64xbf16> to vector<1x8x64xbf16>
    tpu.vector_store %arg6[%c0_10, %c0_11, %c0_12], %13 {strides = array<i32>} : memref<1x8x64xbf16, #tpu.memory_space<vmem>>, vector<1x8x64xbf16>,
    return
  }
  func.func @transform_0(%arg0: i32, %arg1: i32) -> (i32, i32, i32) {
    %c0_i32 = arith.constant 0 : i32
    %c0_i32_0 = arith.constant 0 : i32
    return %arg0, %arg1, %c0_i32 : i32, i32, i32
  }
  func.func @transform_1(%arg0: i32, %arg1: i32) -> (i32, i32) {
    %c0_i32 = arith.constant 0 : i32
    %c0_i32_0 = arith.constant 0 : i32
    %c0_i32_1 = arith.constant 0 : i32
    return %c0_i32, %c0_i32_0 : i32, i32
  }
  func.func @transform_2(%arg0: i32, %arg1: i32) -> (i32, i32) {
    %c0_i32 = arith.constant 0 : i32
    %c0_i32_0 = arith.constant 0 : i32
    %c0_i32_1 = arith.constant 0 : i32
    return %c0_i32, %c0_i32_0 : i32, i32
  }
  func.func @transform_3(%arg0: i32, %arg1: i32) -> (i32, i32, i32) {
    %c0_i32 = arith.constant 0 : i32
    %c0_i32_0 = arith.constant 0 : i32
    return %arg0, %arg1, %c0_i32 : i32, i32, i32
  }
  func.func @transform_4(%arg0: i32, %arg1: i32) -> (i32, i32, i32) {
    %c0_i32 = arith.constant 0 : i32
    %c0_i32_0 = arith.constant 0 : i32
    return %arg0, %arg1, %c0_i32 : i32, i32, i32
  }
}

</mosaic_0001>

<llo_original>
// kernel: tpu_custom_call.1
$region0: #{tpu_custom_call.1}
  #allocation0 [shape = 'u32[]', space=smem, size = 0x4, offset = 0x4, fixed_abs, tag = 'smem constant byte address 0x4 - core index']
  #allocation1 [shape = 'u32[72,128]{1,0:T(1,128)}', space=vmem, size = 0x9000, scoped, tag = 'internal scratch']
  %s0 = inlined_call_operand.hbm [shape: bf16[2,8,32], index: 0, kind: input, shape index: {}]
  %s1 = inlined_call_operand.hbm [shape: bf16[32,32], index: 1, kind: input, shape index: {}]
  %s2 = inlined_call_operand.hbm [shape: bf16[32,64], index: 2, kind: input, shape index: {}]
  %s3 = inlined_call_operand.hbm [shape: bf16[2,8,32], index: 3, kind: output, shape index: {0}]
  %s4 = inlined_call_operand.hbm [shape: bf16[2,8,64], index: 4, kind: output, shape index: {1}]
  %5 = xla_tuple %s3, %s4
  %s6 = sld [smem:[#allocation0]]
  $region65: #{tpu_custom_call.1} parent=0
    _
  %s8 = ssub.s32 1, %s6
  %s9 = scalar_select 0, %s8, %s6
  $region1: #{tpu_custom_call.1} parent=0
    #allocation2 [shape = 'u8[4096]{0}', space=vmem, size = 0x1000, scoped, tag = 'input window, operand 0']
    #allocation3 [shape = 's32[2]{0}', space=sflag, size = 0x8, scoped, tag = 'scoped memory for tpu_custom_call.1']
    #allocation4 [shape = 's32[2]{0}', space=sflag, size = 0x8, scoped, tag = 'scoped memory for tpu_custom_call.1']
    #allocation5 [shape = 'u8[8192]{0}', space=vmem, size = 0x2000, scoped, tag = 'input window, operand 1, single buffered']
    #allocation6 [shape = 's32[1]{0}', space=sflag, size = 0x4, scoped, tag = 'scoped memory for tpu_custom_call.1']
    #allocation7 [shape = 'u8[8192]{0}', space=vmem, size = 0x2000, scoped, tag = 'input window, operand 2, single buffered']
    #allocation8 [shape = 'u8[4096]{0}', space=vmem, size = 0x1000, scoped, tag = 'output window, operand 0']
    #allocation9 [shape = 'u8[4096]{0}', space=vmem, size = 0x1000, scoped, tag = 'output window, operand 1']
    #allocation10 [shape = 's32[2]{0}', space=sflag, size = 0x8, scoped, tag = 'scoped memory for tpu_custom_call.1']
    %10 = vsyncpa [#allocation3], 0
    %s11 = scalar_lea.sflag [#allocation3], 1
    %12 = vsyncpa %s11, 0
    %13 = vsyncpa [#allocation6], 0
    %14 = vsyncpa [#allocation4], 0
    %s15 = scalar_lea.sflag [#allocation4], 1
    %16 = vsyncpa %s15, 0
    %17 = vsyncpa [#allocation10], 0
    %s18 = scalar_lea.sflag [#allocation10], 1
    %19 = vsyncpa %s18, 0
    loop: start=0, step=1, limit=4
    $region2: #{tpu_custom_call.1} parent=1 // loop_pre_header
      _
    $region3: #{tpu_custom_call.1} parent=1 // loop_header
      %s21 = sphi 0, %s25
      %p22 = scmp.ge.s32.totalorder %s21, 4
      %s28 = sphi 0, %s40
      %s29 = sphi 0, %s36
      %s30 = sphi 0, %s28
      %s31 = sphi 0, %s29
      %s32 = sphi 0, %s30
      %s33 = sphi 0, %s31
      %s45 = sphi 0, %s47
      %s48 = sphi 0, %s45
      %s49 = sphi 0, %s48
      %s65 = sphi 0, %s49
      %s69 = sphi 0, %s69
      %s71 = sphi 0, %s69
      %s72 = sphi 0, %s71
      %s86 = sphi 0, %s72
      %s90 = sphi 0, %s90
      %s92 = sphi 0, %s90
      %s93 = sphi 0, %s92
      %s107 = sphi 0, %s93
      %s115 = sphi 0, %s117
      %s118 = sphi 0, %s115
      %s119 = sphi 0, %s118
      %s135 = sphi 0, %s119
      %s143 = sphi 0, %s145
      %s146 = sphi 0, %s143
      %s147 = sphi 0, %s146
      %s163 = sphi 0, %s147
    $region4: #{tpu_custom_call.1} parent=1 // loop_header_branch
      %24 = sbr.rel (%p22) target = $region8
    $region5: #{tpu_custom_call.1} parent=1 // loop_body
      %s26 = ssub.s32 %s21, 1
      %s27 = ssub.s32 %s21, 2
      %s34 = sadd.s32 1, %s29
      %p35 = scmp.ge.s32.totalorder %s34, 1
      %s36 = scalar_select %p35, 0, %s34
      %s37 = sadd.s32 1, %s28
      %s38 = scalar_select %p35, %s37, %s28
      %p39 = scmp.ge.s32.totalorder %s38, 2
      %s40 = scalar_select %p39, 0, %s38
      %s41 = ssub.s32 %s28, %s40
      %s42 = ssub.s32 %s29, %s36
      %s43 = sor.u32 %s41, %s42
      %p44 = scmp.eq.s32.totalorder %s43, 0
      %s46 = sadd.s32 %s45, 1
      %s47 = scalar_select %p44, %s45, %s46
      %p50 = pneg %p44
      %p51 = scmp.eq.s32.totalorder %s21, 1
      %p52 = por %p50, %p51
      %p53 = scmp.ne.s32.totalorder %s45, %s48
      %p54 = scmp.eq.s32.totalorder %s21, 0
      %p55 = por %p53, %p54
      %p56 = scmp.ne.s32.totalorder %s45, %s48
      %p57 = scmp.eq.s32.totalorder %s26, 1
      %p58 = por %p56, %p57
      %p59 = scmp.ne.s32.totalorder %s48, %s49
      %p60 = scmp.eq.s32.totalorder %s26, 0
      %p61 = por %p59, %p60
      %p62 = scmp.ne.s32.totalorder %s48, %s49
      %p63 = scmp.eq.s32.totalorder %s27, 1
      %p64 = por %p62, %p63
      %p66 = scmp.ne.s32.totalorder %s49, %s65
      %p67 = scmp.eq.s32.totalorder %s27, 0
      %p68 = por %p66, %p67
      %s70 = sadd.s32 %s69, 1
      %p73 = scmp.eq.s32.totalorder %s21, 1
      %p74 = scmp.ne.s32.totalorder %s69, %s71
      %p75 = scmp.eq.s32.totalorder %s21, 0
      %p76 = por %p74, %p75
      %p77 = scmp.ne.s32.totalorder %s69, %s71
      %p78 = scmp.eq.s32.totalorder %s26, 1
      %p79 = por %p77, %p78
      %p80 = scmp.ne.s32.totalorder %s71, %s72
      %p81 = scmp.eq.s32.totalorder %s26, 0
      %p82 = por %p80, %p81
      %p83 = scmp.ne.s32.totalorder %s71, %s72
      %p84 = scmp.eq.s32.totalorder %s27, 1
      %p85 = por %p83, %p84
      %p87 = scmp.ne.s32.totalorder %s72, %s86
      %p88 = scmp.eq.s32.totalorder %s27, 0
      %p89 = por %p87, %p88
      %s91 = sadd.s32 %s90, 1
      %p94 = scmp.eq.s32.totalorder %s21, 1
      %p95 = scmp.ne.s32.totalorder %s90, %s92
      %p96 = scmp.eq.s32.totalorder %s21, 0
      %p97 = por %p95, %p96
      %p98 = scmp.ne.s32.totalorder %s90, %s92
      %p99 = scmp.eq.s32.totalorder %s26, 1
      %p100 = por %p98, %p99
      %p101 = scmp.ne.s32.totalorder %s92, %s93
      %p102 = scmp.eq.s32.totalorder %s26, 0
      %p103 = por %p101, %p102
      %p104 = scmp.ne.s32.totalorder %s92, %s93
      %p105 = scmp.eq.s32.totalorder %s27, 1
      %p106 = por %p104, %p105
      %p108 = scmp.ne.s32.totalorder %s93, %s107
      %p109 = scmp.eq.s32.totalorder %s27, 0
      %p110 = por %p108, %p109
      %s111 = ssub.s32 %s28, %s40
      %s112 = ssub.s32 %s29, %s36
      %s113 = sor.u32 %s111, %s112
      %p114 = scmp.eq.s32.totalorder %s113, 0
      %s116 = sadd.s32 %s115, 1
      %s117 = scalar_select %p114, %s115, %s116
      %p120 = pneg %p114
      %p121 = scmp.eq.s32.totalorder %s21, 1
      %p122 = por %p120, %p121
      %p123 = scmp.ne.s32.totalorder %s115, %s118
      %p124 = scmp.eq.s32.totalorder %s21, 0
      %p125 = por %p123, %p124
      %p126 = scmp.ne.s32.totalorder %s115, %s118
      %p127 = scmp.eq.s32.totalorder %s26, 1
      %p128 = por %p126, %p127
      %p129 = scmp.ne.s32.totalorder %s118, %s119
      %p130 = scmp.eq.s32.totalorder %s26, 0
      %p131 = por %p129, %p130
      %p132 = scmp.ne.s32.totalorder %s118, %s119
      %p133 = scmp.eq.s32.totalorder %s27, 1
      %p134 = por %p132, %p133
      %p136 = scmp.ne.s32.totalorder %s119, %s135
      %p137 = scmp.eq.s32.totalorder %s27, 0
      %p138 = por %p136, %p137
      %s139 = ssub.s32 %s28, %s40
      %s140 = ssub.s32 %s29, %s36
      %s141 = sor.u32 %s139, %s140
      %p142 = scmp.eq.s32.totalorder %s141, 0
      %s144 = sadd.s32 %s143, 1
      %s145 = scalar_select %p142, %s143, %s144
      %p148 = pneg %p142
      %p149 = scmp.eq.s32.totalorder %s21, 1
      %p150 = por %p148, %p149
      %p151 = scmp.ne.s32.totalorder %s143, %s146
      %p152 = scmp.eq.s32.totalorder %s21, 0
      %p153 = por %p151, %p152
      %p154 = scmp.ne.s32.totalorder %s143, %s146
      %p155 = scmp.eq.s32.totalorder %s26, 1
      %p156 = por %p154, %p155
      %p157 = scmp.ne.s32.totalorder %s146, %s147
      %p158 = scmp.eq.s32.totalorder %s26, 0
      %p159 = por %p157, %p158
      %p160 = scmp.ne.s32.totalorder %s146, %s147
      %p161 = scmp.eq.s32.totalorder %s27, 1
      %p162 = por %p160, %p161
      %p164 = scmp.ne.s32.totalorder %s147, %s163
      %p165 = scmp.eq.s32.totalorder %s27, 0
      %p166 = por %p164, %p165
      %p167 = scmp.le.s32.totalorder 1, %s21
      %p168 = scmp.lt.s32.totalorder %s21, 3
      %p169 = pnand %p167, %p168
      %p170 = pneg %p169
      // Predicated region
      $region9: #{tpu_custom_call.1} parent=5 // pred_check
        _
      $region10: #{tpu_custom_call.1} parent=5 // pred_check_branch
        %172 = sbr.rel (%p169) target = $region12
      $region11: #{tpu_custom_call.1} parent=5 // pred_region
        %s173 = ssub.s32 %s21, 1
        // Predicated region
        $region13: #{tpu_custom_call.1} parent=11 // pred_check
          %p174 = pneg %p82
        $region14: #{tpu_custom_call.1} parent=11 // pred_check_branch
          %176 = sbr.rel (%p174) target = $region16
        $region15: #{tpu_custom_call.1} parent=11 // pred_region
          %178 = vsyncadd [#allocation6], 0
          %s179 = sshll.u32 %s1, 4
          %s180 = int_to_ptr.hbm [resolvable:$true] %s179
          %s181 = sshll.u32 [#allocation5], 4
          %s182 = int_to_ptr.vmem [resolvable:$true] %s181
          %187 = dma.hbm_to_vmem [thread:$0]  %s180, 256, %s182, [#allocation6], 64, 64, 4
        $region16: #{tpu_custom_call.1} parent=11 // pred_fallthru
          _
        // Predicated region
        $region17: #{tpu_custom_call.1} parent=11 // pred_check
          %p188 = pneg %p103
        $region18: #{tpu_custom_call.1} parent=11 // pred_check_branch
          %190 = sbr.rel (%p188) target = $region20
        $region19: #{tpu_custom_call.1} parent=11 // pred_region
          %192 = vsyncadd [#allocation6], 0
          %s193 = sshll.u32 %s2, 4
          %s194 = int_to_ptr.hbm [resolvable:$true] %s193
          %s195 = sshll.u32 [#allocation7], 4
          %s196 = int_to_ptr.vmem [resolvable:$true] %s195
          %201 = dma.hbm_to_vmem [thread:$0]  %s194, 256, %s196, [#allocation6], 64, 64, 4
        $region20: #{tpu_custom_call.1} parent=11 // pred_fallthru
          _
      $region12: #{tpu_custom_call.1} parent=5 // pred_fallthru
        _
      %p202 = scmp.lt.s32.totalorder %s21, 2
      // Predicated region
      $region21: #{tpu_custom_call.1} parent=5 // pred_check
        %p203 = pneg %p202
      $region22: #{tpu_custom_call.1} parent=5 // pred_check_branch
        %205 = sbr.rel (%p203) target = $region24
      $region23: #{tpu_custom_call.1} parent=5 // pred_region
        // Predicated region
        $region25: #{tpu_custom_call.1} parent=23 // pred_check
          %p206 = pneg %p55
        $region26: #{tpu_custom_call.1} parent=23 // pred_check_branch
          %208 = sbr.rel (%p206) target = $region28
        $region27: #{tpu_custom_call.1} parent=23 // pred_region
          %s209 = sand.u32 %s45, 1
          %s210 = scalar_lea.sflag [#allocation3], %s209
          %s211 = sand.u32 %s45, 1
          %s212 = smul.addr %s211, 4
          %s213 = scalar_lea.vmem [#allocation2], %s212
          %215 = vsyncadd %s210, 0
          %s216 = sadd.s32 %s29, %s28
          %s217 = smul.addr %s216, 4
          %s218 = scalar_lea.hbm %s0, %s217
          %s220 = sshll.u32 %s218, 4
          %s221 = int_to_ptr.hbm [resolvable:$true] %s220
          %s222 = sshll.u32 %s213, 4
          %s223 = int_to_ptr.vmem [resolvable:$true] %s222
          %225 = dma.hbm_to_vmem [thread:$0]  %s221, 64, %s223, %s210
        $region28: #{tpu_custom_call.1} parent=23 // pred_fallthru
          _
      $region24: #{tpu_custom_call.1} parent=5 // pred_fallthru
        _
      %p226 = scmp.le.s32.totalorder 1, %s21
      %p227 = scmp.lt.s32.totalorder %s21, 3
      %p228 = pnand %p226, %p227
      %p229 = pneg %p228
      // Predicated region
      $region29: #{tpu_custom_call.1} parent=5 // pred_check
        _
      $region30: #{tpu_custom_call.1} parent=5 // pred_check_branch
        %231 = sbr.rel (%p228) target = $region32
      $region31: #{tpu_custom_call.1} parent=5 // pred_region
        %s232 = ssub.s32 %s21, 1
        %s233 = sand.u32 %s48, 1
        %s234 = scalar_lea.sflag [#allocation3], %s233
        %s235 = sand.u32 %s48, 1
        %s236 = smul.addr %s235, 4
        %s237 = scalar_lea.vmem [#allocation2], %s236
        // Predicated region
        $region33: #{tpu_custom_call.1} parent=31 // pred_check
          %p238 = pneg %p61
        $region34: #{tpu_custom_call.1} parent=31 // pred_check_branch
          %240 = sbr.rel (%p238) target = $region36
        $region35: #{tpu_custom_call.1} parent=31 // pred_region
          %242 = dma.done %s234, 64
        $region36: #{tpu_custom_call.1} parent=31 // pred_fallthru
          _
        // Predicated region
        $region37: #{tpu_custom_call.1} parent=31 // pred_check
          %p243 = pneg %p82
        $region38: #{tpu_custom_call.1} parent=31 // pred_check_branch
          %245 = sbr.rel (%p243) target = $region40
        $region39: #{tpu_custom_call.1} parent=31 // pred_region
          %247 = dma.done [#allocation6], 256
        $region40: #{tpu_custom_call.1} parent=31 // pred_fallthru
          _
        // Predicated region
        $region41: #{tpu_custom_call.1} parent=31 // pred_check
          %p248 = pneg %p103
        $region42: #{tpu_custom_call.1} parent=31 // pred_check_branch
          %250 = sbr.rel (%p248) target = $region44
        $region43: #{tpu_custom_call.1} parent=31 // pred_region
          %252 = dma.done [#allocation6], 256
        $region44: #{tpu_custom_call.1} parent=31 // pred_fallthru
          _
        %s253 = sand.u32 %s48, 1
        %s254 = scalar_lea.sflag [#allocation3], %s253
        %s255 = sand.u32 %s48, 1
        %s256 = smul.addr %s255, 4
        %s257 = scalar_lea.vmem [#allocation2], %s256
        %p258 = pneg %p61
        %p259 = pneg %p58
        %p260 = pneg %p82
        %p261 = pneg %p79
        %p262 = pneg %p103
        %p263 = pneg %p100
        %p264 = pneg %p131
        %p265 = pneg %p128
        %s266 = sand.u32 %s118, 1
        %s267 = scalar_lea.sflag [#allocation4], %s266
        %s268 = sand.u32 %s118, 1
        %s269 = smul.addr %s268, 4
        %s270 = scalar_lea.vmem [#allocation8], %s269
        %p271 = pneg %p159
        %p272 = pneg %p156
        %s273 = sand.u32 %s146, 1
        %s274 = scalar_lea.sflag [#allocation10], %s273
        %s275 = sand.u32 %s146, 1
        %s276 = smul.addr %s275, 4
        %s277 = scalar_lea.vmem [#allocation9], %s276
        %v279 = vld [vmem:[%s237] sm:$0xf]
        %v280 = vld [vmem:[#allocation5] sm:$0xf]
        %v281 = vld [vmem:[#allocation5 + $0x4] sm:$0xf]
        %v282 = vld [vmem:[#allocation5 + $0x8] sm:$0xf]
        %v283 = vld [vmem:[#allocation5 + $0xc] sm:$0xf]
        %v288 = vunpack.c.l.b16 %v280
        %v289 = vunpack.c.l.b16 %v281
        %v290 = vunpack.c.l.b16 %v282
        %v291 = vunpack.c.l.b16 %v283
        %v292 = vpack.c.b16 %v289, %v288
        %v293 = vpack.c.b16 %v291, %v290
        %vm296 = vcmask 261120
        %v298 = vsel %vm296, %v279, 0
        %300 = vmatpush.bf16.msra.mxu0 0
        %301 = vmatpush.bf16.msra.mxu0 0
        %302 = vmatpush.bf16.msra.mxu0 0
        %303 = vmatpush.bf16.msra.mxu0 0
        %304 = vmatpush.bf16.msra.mxu0 0
        %305 = vmatpush.bf16.msra.mxu0 0
        %306 = vmatpush.bf16.msra.mxu0 %v293
        %307 = vmatpush.bf16.msra.mxu0 %v292
        %308 = vmatmul.bf16.gmra.mxu0 %v298
        %v309 = vpop.f32.mrf.mxu0
        %v310 = vadd.f32 0.0, %v309
        %v311 = vpop.f32.mrf.mxu0
        %312 = vdwg.mxu0
        %v313 = vpack.c.bf16 %v310, %v310
        %vm314 = vcmask 257024
        %315 = vst.msk [vmem:[%s270] sm:$0xf] %vm314, %v313
        %v316 = vld [vmem:[#allocation7] sm:$0xf]
        %v317 = vld [vmem:[#allocation7 + $0x4] sm:$0xf]
        %v318 = vld [vmem:[#allocation7 + $0x8] sm:$0xf]
        %v319 = vld [vmem:[#allocation7 + $0xc] sm:$0xf]
        %v324 = vunpack.c.l.b16 %v316
        %v325 = vunpack.c.l.b16 %v317
        %v326 = vunpack.c.l.b16 %v318
        %v327 = vunpack.c.l.b16 %v319
        %v328 = vpack.c.b16 %v325, %v324
        %v329 = vpack.c.b16 %v327, %v326
        %332 = vmatpush.bf16.msra.mxu0 0
        %333 = vmatpush.bf16.msra.mxu0 0
        %334 = vmatpush.bf16.msra.mxu0 0
        %335 = vmatpush.bf16.msra.mxu0 0
        %336 = vmatpush.bf16.msra.mxu0 0
        %337 = vmatpush.bf16.msra.mxu0 0
        %338 = vmatpush.bf16.msra.mxu0 %v329
        %339 = vmatpush.bf16.msra.mxu0 %v328
        %340 = vmatmul.bf16.gmra.mxu0 %v298
        %v341 = vpop.f32.mrf.mxu0
        %v342 = vadd.f32 0.0, %v341
        %v343 = vpop.f32.mrf.mxu0
        %344 = vdwg.mxu0
        %v345 = vpack.c.bf16 %v342, %v342
        %vm346 = vcmask 519168
        %347 = vst.msk [vmem:[%s277] sm:$0xf] %vm346, %v345
        %s348 = sand.u32 %s118, 1
        %s349 = scalar_lea.sflag [#allocation4], %s348
        %s350 = sand.u32 %s118, 1
        %s351 = smul.addr %s350, 4
        %s352 = scalar_lea.vmem [#allocation8], %s351
        %s353 = sand.u32 %s146, 1
        %s354 = scalar_lea.sflag [#allocation10], %s353
        %s355 = sand.u32 %s146, 1
        %s356 = smul.addr %s355, 4
        %s357 = scalar_lea.vmem [#allocation9], %s356
        // Predicated region
        $region45: #{tpu_custom_call.1} parent=31 // pred_check
          %p358 = pneg %p128
        $region46: #{tpu_custom_call.1} parent=31 // pred_check_branch
          %360 = sbr.rel (%p358) target = $region48
        $region47: #{tpu_custom_call.1} parent=31 // pred_region
          %362 = vsyncadd %s349, 0
          %s363 = sadd.s32 %s31, %s30
          %s364 = smul.addr %s363, 4
          %s365 = scalar_lea.hbm %s3, %s364
          %s367 = sshll.u32 %s352, 4
          %s368 = int_to_ptr.vmem [resolvable:$true] %s367
          %s369 = sshll.u32 %s365, 4
          %s370 = int_to_ptr.hbm [resolvable:$true] %s369
          %372 = dma.vmem_to_hbm [thread:$0]  %s368, 64, %s370, %s349
        $region48: #{tpu_custom_call.1} parent=31 // pred_fallthru
          _
        // Predicated region
        $region49: #{tpu_custom_call.1} parent=31 // pred_check
          %p373 = pneg %p156
        $region50: #{tpu_custom_call.1} parent=31 // pred_check_branch
          %375 = sbr.rel (%p373) target = $region52
        $region51: #{tpu_custom_call.1} parent=31 // pred_region
          %377 = vsyncadd %s354, 0
          %s378 = sadd.s32 %s31, %s30
          %s379 = smul.addr %s378, 4
          %s380 = scalar_lea.hbm %s4, %s379
          %s382 = sshll.u32 %s357, 4
          %s383 = int_to_ptr.vmem [resolvable:$true] %s382
          %s384 = sshll.u32 %s380, 4
          %s385 = int_to_ptr.hbm [resolvable:$true] %s384
          %387 = dma.vmem_to_hbm [thread:$0]  %s383, 64, %s385, %s354
        $region52: #{tpu_custom_call.1} parent=31 // pred_fallthru
          _
      $region32: #{tpu_custom_call.1} parent=5 // pred_fallthru
        _
      %p388 = scmp.le.s32.totalorder 2, %s21
      // Predicated region
      $region53: #{tpu_custom_call.1} parent=5 // pred_check
        %p389 = pneg %p388
      $region54: #{tpu_custom_call.1} parent=5 // pred_check_branch
        %391 = sbr.rel (%p389) target = $region56
      $region55: #{tpu_custom_call.1} parent=5 // pred_region
        %s392 = ssub.s32 %s21, 2
        // Predicated region
        $region57: #{tpu_custom_call.1} parent=55 // pred_check
          %p393 = pneg %p134
        $region58: #{tpu_custom_call.1} parent=55 // pred_check_branch
          %395 = sbr.rel (%p393) target = $region60
        $region59: #{tpu_custom_call.1} parent=55 // pred_region
          %s396 = sand.u32 %s119, 1
          %s397 = scalar_lea.sflag [#allocation4], %s396
          %s398 = sand.u32 %s119, 1
          %s399 = smul.addr %s398, 4
          %s400 = scalar_lea.vmem [#allocation8], %s399
          %402 = dma.done %s397, 64
        $region60: #{tpu_custom_call.1} parent=55 // pred_fallthru
          _
        // Predicated region
        $region61: #{tpu_custom_call.1} parent=55 // pred_check
          %p403 = pneg %p162
        $region62: #{tpu_custom_call.1} parent=55 // pred_check_branch
          %405 = sbr.rel (%p403) target = $region64
        $region63: #{tpu_custom_call.1} parent=55 // pred_region
          %s406 = sand.u32 %s147, 1
          %s407 = scalar_lea.sflag [#allocation10], %s406
          %s408 = sand.u32 %s147, 1
          %s409 = smul.addr %s408, 4
          %s410 = scalar_lea.vmem [#allocation9], %s409
          %412 = dma.done %s407, 64
        $region64: #{tpu_custom_call.1} parent=55 // pred_fallthru
          _
      $region56: #{tpu_custom_call.1} parent=5 // pred_fallthru
        _
    $region6: #{tpu_custom_call.1} parent=1 // loop_footer
      %s25 = sadd.s32 1, %s21
    $region7: #{tpu_custom_call.1} parent=1 // loop_footer_branch
      %20 = sbr.rel target = $region3
    $region8: #{tpu_custom_call.1} parent=1 // loop_exit
      _
    %413 = vsyncpa [#allocation3], 1
    %s414 = scalar_lea.sflag [#allocation3], 1
    %415 = vsyncpa %s414, 1
    %416 = vsyncpa [#allocation6], 1
    %417 = vsyncpa [#allocation4], 1
    %s418 = scalar_lea.sflag [#allocation4], 1
    %419 = vsyncpa %s418, 1
    %420 = vsyncpa [#allocation10], 1
    %s421 = scalar_lea.sflag [#allocation10], 1
    %422 = vsyncpa %s421, 1

</llo_original>
